<compile_context>
chip_gen: v6e
topology: v6e:2x2x1
jax: 0.10.0
libtpu: 0.0.40
codegen_flags: <defaults>
</compile_context>

<pallas_src>
import jax
import jax.numpy as jnp
from jax.experimental import pallas as pl
from jax.experimental.pallas import tpu as pltpu

EPS = 1e-5

# Scoped-VMEM limit: our blocks use <= ~16-20 MiB double-buffered; 32 MiB is
# safe on every generation (v5e/v6e: 128 MiB physical, v7x: 64 MiB physical).
_VMEM_LIMIT_BYTES = 32 * 1024 * 1024
# Target bytes per (input or output) block; ~4 MiB reaches ~85% of the HBM
# roofline in measured mem-bound kernels while fitting every generation
# (including v7x's smaller VMEM) with double buffering.
_TARGET_BLOCK_BYTES = 4 * 1024 * 1024
_MAX_ROW_TILE = 4096


def _round_up(x, m):
    return ((x + m - 1) // m) * m


def _sublane_granule(dtype):
    # f32 -> 8, bf16 -> 16, int8/fp8 -> 32 (packed-sublane tiling constraint).
    return max(8, 32 // jnp.dtype(dtype).itemsize)


def _pick_row_tile(n_rows, n_cols, itemsize, granule):
    per_row_bytes = max(1, n_cols * itemsize)
    rt = _TARGET_BLOCK_BYTES // per_row_bytes
    rt = max(granule, (rt // granule) * granule)
    rt = min(rt, _MAX_ROW_TILE)
    rt = min(rt, _round_up(n_rows, granule))
    return max(granule, rt)


# ----------------------------- LayerNorm kernels -----------------------------
def _layer_norm_affine_kernel(x_ref, w_ref, b_ref, o_ref):
    # x_ref: (row_tile, F) tile of the flattened (rows, F) input.
    x = x_ref[...].astype(jnp.float32)
    mean = jnp.mean(x, axis=-1, keepdims=True)
    xc = x - mean
    var = jnp.mean(xc * xc, axis=-1, keepdims=True)   # biased var (PyTorch LN)
    inv = jax.lax.rsqrt(var + EPS)
    y = xc * inv * w_ref[...].astype(jnp.float32) + b_ref[...].astype(jnp.float32)
    o_ref[...] = y.astype(o_ref.dtype)


def _layer_norm_plain_kernel(x_ref, o_ref):
    x = x_ref[...].astype(jnp.float32)
    mean = jnp.mean(x, axis=-1, keepdims=True)
    xc = x - mean
    var = jnp.mean(xc * xc, axis=-1, keepdims=True)
    inv = jax.lax.rsqrt(var + EPS)
    o_ref[...] = (xc * inv).astype(o_ref.dtype)


def layer_norm(x, weight=None, bias=None, *, affine=True):
    orig_shape = x.shape
    F = orig_shape[-1]
    x2 = x.reshape(-1, F)
    R = x2.shape[0]

    itemsize = jnp.dtype(x.dtype).itemsize
    granule = _sublane_granule(x.dtype)
    row_tile = _pick_row_tile(R, F, itemsize, granule)
    R_pad = _round_up(R, row_tile)
    if R_pad != R:
        # Zero-pad ragged tail rows; padded rows normalize to finite values
        # and are sliced off below.
        x2 = jnp.pad(x2, ((0, R_pad - R), (0, 0)))

    grid = (R_pad // row_tile,)
    x_spec = pl.BlockSpec((row_tile, F), lambda i: (i, 0))
    out_spec = pl.BlockSpec((row_tile, F), lambda i: (i, 0))
    cp = pltpu.CompilerParams(
        dimension_semantics=("parallel",),              # shards across TCs on v7x
        vmem_limit_bytes=_VMEM_LIMIT_BYTES,
    )
    # NOTE: for best store efficiency F should be a multiple of 128; narrower
    # F is correct but uses lane-masked stores.

    if affine:
        out = pl.pallas_call(
            _layer_norm_affine_kernel,
            out_shape=jax.ShapeDtypeStruct((R_pad, F), x.dtype),
            grid=grid,
            in_specs=[x_spec,
                      pl.BlockSpec((1, F), lambda i: (0, 0)),
                      pl.BlockSpec((1, F), lambda i: (0, 0))],
            out_specs=out_spec,
            compiler_params=cp,
        )(x2, weight.reshape(1, F), bias.reshape(1, F))
    else:
        # affine=False: do not DMA weight/bias at all.
        out = pl.pallas_call(
            _layer_norm_plain_kernel,
            out_shape=jax.ShapeDtypeStruct((R_pad, F), x.dtype),
            grid=grid,
            in_specs=[x_spec],
            out_specs=out_spec,
            compiler_params=cp,
        )(x2)

    if R_pad != R:
        out = out[:R]
    return out.reshape(orig_shape)


# ----------------------------- BatchNorm kernels ------------------------------
def _bn_stats_kernel(x_ref, stats_ref):
    # Pass 1: accumulate per-lane sum (row 0) and sum-of-squares (row 1) over
    # all row tiles into a resident (2, F_lane) f32 output.
    x = x_ref[...].astype(jnp.float32)
    s = jnp.sum(x, axis=0, keepdims=True)
    sq = jnp.sum(x * x, axis=0, keepdims=True)
    partial = jnp.concatenate([s, sq], axis=0)

    @pl.when(pl.program_id(0) == 0)
    def _():
        stats_ref[...] = jnp.zeros_like(stats_ref)

    stats_ref[...] += partial


def _bn_apply_kernel(x_ref, scale_ref, shift_ref, o_ref):
    # Pass 2: y = x * scale + shift (scale/shift pre-folded per feature).
    x = x_ref[...].astype(jnp.float32)
    y = x * scale_ref[...].astype(jnp.float32) + shift_ref[...].astype(jnp.float32)
    o_ref[...] = y.astype(o_ref.dtype)


def batch_norm(x, weight=None, bias=None, *, affine=True):
    # Wrapper semantics: 3-D input (N, L, C) is normalized per-channel C over
    # (N, L); 2-D input (N, C) over N.  Both collapse to a (-1, C) reduction.
    orig_shape = x.shape
    F = orig_shape[-1]
    x2 = x.reshape(-1, F)
    R = x2.shape[0]
    dtype = x.dtype
    itemsize = jnp.dtype(dtype).itemsize
    granule = _sublane_granule(dtype)

    # Lane folding: if F is narrow (F < 128 and divides 128), pack g rows
    # side-by-side so the last dim is a lane-dense multiple of 128 (no masked
    # stores).  Exact for per-feature reductions + elementwise apply.
    g = 128 // F if (F < 128 and 128 % F == 0) else 1
    F_lane = g * F

    folded_rows_needed = (R + g - 1) // g
    row_tile = _pick_row_tile(folded_rows_needed, F_lane, itemsize, granule)
    R_pad = _round_up(R, g * row_tile)
    if R_pad != R:
        # Zero rows contribute 0 to sum/sum-sq; we divide by the true R below.
        x2p = jnp.pad(x2, ((0, R_pad - R), (0, 0)))
    else:
        x2p = x2
    xf = x2p.reshape(R_pad // g, F_lane)
    n_blocks = (R_pad // g) // row_tile

    # ---- Pass 1: per-feature sum / sum-of-squares (resident accumulator). ----
    stats = pl.pallas_call(
        _bn_stats_kernel,
        out_shape=jax.ShapeDtypeStruct((2, F_lane), jnp.float32),
        grid=(n_blocks,),
        in_specs=[pl.BlockSpec((row_tile, F_lane), lambda i: (i, 0))],
        out_specs=pl.BlockSpec((2, F_lane), lambda i: (0, 0)),
        compiler_params=pltpu.CompilerParams(
            dimension_semantics=("arbitrary",),        # reduction axis
            vmem_limit_bytes=_VMEM_LIMIT_BYTES,
        ),
    )(xf)

    # Fold the lane groups back to per-feature stats and pre-compute
    # scale/shift (tiny (1, F) work; keeps the apply pass at 2 ops/element).
    stats = stats.reshape(2, g, F).sum(axis=1)         # (2, F)
    mean = stats[0] / R
    var = jnp.maximum(stats[1] / R - mean * mean, 0.0)  # biased var (train-mode BN)
    inv = jax.lax.rsqrt(var + EPS)
    if affine:
        scale = inv * weight.astype(jnp.float32)
        shift = bias.astype(jnp.float32) - mean * scale
    else:
        scale = inv
        shift = -mean * scale
    scale_l = jnp.tile(scale.reshape(1, F), (1, g))     # (1, F_lane)
    shift_l = jnp.tile(shift.reshape(1, F), (1, g))

    # ---- Pass 2: elementwise apply, row-tiled, parallel across TCs. ----------
    out = pl.pallas_call(
        _bn_apply_kernel,
        out_shape=jax.ShapeDtypeStruct((R_pad // g, F_lane), dtype),
        grid=(n_blocks,),
        in_specs=[pl.BlockSpec((row_tile, F_lane), lambda i: (i, 0)),
                  pl.BlockSpec((1, F_lane), lambda i: (0, 0)),
                  pl.BlockSpec((1, F_lane), lambda i: (0, 0))],
        out_specs=pl.BlockSpec((row_tile, F_lane), lambda i: (i, 0)),
        compiler_params=pltpu.CompilerParams(
            dimension_semantics=("parallel",),
            vmem_limit_bytes=_VMEM_LIMIT_BYTES,
        ),
    )(xf, scale_l, shift_l)

    out = out.reshape(R_pad, F)
    if R_pad != R:
        out = out[:R]
    return out.reshape(orig_shape)
    # TODO(synk): running_mean/running_var momentum buffers are not updated;
    # they do not affect the training-mode forward output.


# ------------------------------- NormWrapper ---------------------------------
class NormWrapper:
    """Mirrors the PyTorch NormWrapper forward pass."""

    LAYER = "layer"
    BATCH = "batch"
    PASS_THROUGH = "pass_through"

    def __init__(self, nr_features, affine=True, norm_type="layer", key=None):
        self.nr_features = nr_features
        self.affine = affine
        self.norm_type = norm_type
        if key is None:
            key = jax.random.PRNGKey(1)
        if affine:
            kw, kb = jax.random.split(key)
            # Deterministic, non-trivial affine params (synthetic init).
            self.weight = 1.0 + 0.1 * jax.random.normal(kw, (nr_features,), jnp.float32)
            self.bias = 0.1 * jax.random.normal(kb, (nr_features,), jnp.float32)
        else:
            self.weight = None
            self.bias = None

    def __call__(self, inp):
        if self.norm_type == self.LAYER:
            return layer_norm(inp, self.weight, self.bias, affine=self.affine)
        elif self.norm_type == self.BATCH:
            return batch_norm(inp, self.weight, self.bias, affine=self.affine)
        elif self.norm_type == self.PASS_THROUGH:
            return inp
        else:
            raise ValueError(f"Unsupported norm type `{self.norm_type}`.")


# --------------------------------- reference ---------------------------------
def _layer_norm_ref(x, w=None, b=None):
    m = jnp.mean(x, axis=-1, keepdims=True)
    v = jnp.mean((x - m) ** 2, axis=-1, keepdims=True)
    y = (x - m) * jax.lax.rsqrt(v + EPS)
    if w is not None:
        y = y * w + b
    return y


def _batch_norm_ref(x, w=None, b=None):
    x2 = x.reshape(-1, x.shape[-1])
    m = jnp.mean(x2, axis=0, keepdims=True)
    v = jnp.mean((x2 - m) ** 2, axis=0, keepdims=True)
    y = (x2 - m) * jax.lax.rsqrt(v + EPS)
    if w is not None:
        y = y * w + b
    return y.reshape(x.shape)


if __name__ == "__main__":
    B, S, F = 2, 8, 32
    key = jax.random.PRNGKey(0)
    k1, k2, k3 = jax.random.split(key, 3)
    x = jax.random.normal(k1, (B, S, F), dtype=jnp.float32)        # 3-D, feature-last
    x2d = jax.random.normal(k2, (10, F), dtype=jnp.float32)        # 2-D, ragged rows
    x_rag = jax.random.normal(k3, (5, F), dtype=jnp.float32)       # ragged LayerNorm

    ln = NormWrapper(F, affine=True, norm_type=NormWrapper.LAYER,
                     key=jax.random.PRNGKey(1))
    ln_na = NormWrapper(F, affine=False, norm_type=NormWrapper.LAYER)
    bn = NormWrapper(F, affine=True, norm_type=NormWrapper.BATCH,
                     key=jax.random.PRNGKey(2))
    pt = NormWrapper(F, affine=True, norm_type=NormWrapper.PASS_THROUGH,
                     key=jax.random.PRNGKey(3))

    y_ln = jax.block_until_ready(ln(x))
    y_ln_na = jax.block_until_ready(ln_na(x_rag))
    y_bn3 = jax.block_until_ready(bn(x))
    y_bn2 = jax.block_until_ready(bn(x2d))
    y_pt = jax.block_until_ready(pt(x))

    # Sanity checks against pure-JAX references.
    assert jnp.allclose(y_ln, _layer_norm_ref(x, ln.weight, ln.bias), atol=1e-5)
    assert jnp.allclose(y_ln_na, _layer_norm_ref(x_rag), atol=1e-5)
    assert jnp.allclose(y_bn3, _batch_norm_ref(x, bn.weight, bn.bias), atol=1e-5)
    assert jnp.allclose(y_bn2, _batch_norm_ref(x2d, bn.weight, bn.bias), atol=1e-5)
    assert jnp.allclose(y_pt, x)

    print("KERNEL_OK")
</pallas_src>

<mosaic_0001>
module attributes {stable_mosaic.version = 11 : i64} {
  func.func @_layer_norm_affine_kernel(%arg0: i32, %arg1: memref<16x32xf32, #tpu.memory_space<vmem>>, %arg2: memref<1x32xf32, #tpu.memory_space<vmem>>, %arg3: memref<1x32xf32, #tpu.memory_space<vmem>>, %arg4: memref<16x32xf32, #tpu.memory_space<vmem>>) attributes {dimension_semantics = [#tpu.dimension_semantics<parallel>], iteration_bounds = array<i64: 1>, scalar_prefetch = 0 : i64, scratch_operands = 0 : i64, tpu.core_type = #tpu.core_type<tc>, window_params = [{transform_indices = @transform_0, window_bounds = array<i64: 16, 32>}, {pipeline_mode = #tpu.pipeline_mode<synchronous>, transform_indices = @transform_1, window_bounds = array<i64: 1, 32>}, {pipeline_mode = #tpu.pipeline_mode<synchronous>, transform_indices = @transform_2, window_bounds = array<i64: 1, 32>}, {transform_indices = @transform_3, window_bounds = array<i64: 16, 32>}]} {
    %c0 = arith.constant 0 : index
    %c0_0 = arith.constant 0 : index
    %0 = vector.load %arg1[%c0, %c0_0] : memref<16x32xf32, #tpu.memory_space<vmem>>, vector<16x32xf32>
    %cst = arith.constant dense<0.000000e+00> : vector<16xf32>
    %1 = vector.multi_reduction <add>, %0, %cst [1] : vector<16x32xf32> to vector<16xf32>
    %2 = vector.shape_cast %1 : vector<16xf32> to vector<16x1xf32>
    %cst_1 = arith.constant 3.200000e+01 : f32
    %3 = vector.broadcast %cst_1 : f32 to vector<16x1xf32>
    %4 = arith.divf %2, %3 : vector<16x1xf32>
    %5 = vector.broadcast %4 : vector<16x1xf32> to vector<16x32xf32>
    %6 = arith.subf %0, %5 : vector<16x32xf32>
    %7 = arith.mulf %6, %6 : vector<16x32xf32>
    %cst_2 = arith.constant dense<0.000000e+00> : vector<16xf32>
    %8 = vector.multi_reduction <add>, %7, %cst_2 [1] : vector<16x32xf32> to vector<16xf32>
    %9 = vector.shape_cast %8 : vector<16xf32> to vector<16x1xf32>
    %cst_3 = arith.constant 3.200000e+01 : f32
    %10 = vector.broadcast %cst_3 : f32 to vector<16x1xf32>
    %11 = arith.divf %9, %10 : vector<16x1xf32>
    %cst_4 = arith.constant 9.99999974E-6 : f32
    %12 = vector.broadcast %cst_4 : f32 to vector<16x1xf32>
    %13 = arith.addf %11, %12 : vector<16x1xf32>
    %14 = math.rsqrt %13 : vector<16x1xf32>
    %15 = vector.broadcast %14 : vector<16x1xf32> to vector<16x32xf32>
    %16 = arith.mulf %6, %15 : vector<16x32xf32>
    %c0_5 = arith.constant 0 : index
    %c0_6 = arith.constant 0 : index
    %17 = vector.load %arg2[%c0_5, %c0_6] : memref<1x32xf32, #tpu.memory_space<vmem>>, vector<1x32xf32>
    %18 = vector.broadcast %17 : vector<1x32xf32> to vector<16x32xf32>
    %19 = arith.mulf %16, %18 : vector<16x32xf32>
    %c0_7 = arith.constant 0 : index
    %c0_8 = arith.constant 0 : index
    %20 = vector.load %arg3[%c0_7, %c0_8] : memref<1x32xf32, #tpu.memory_space<vmem>>, vector<1x32xf32>
    %21 = vector.broadcast %20 : vector<1x32xf32> to vector<16x32xf32>
    %22 = arith.addf %19, %21 : vector<16x32xf32>
    %c0_9 = arith.constant 0 : index
    %c0_10 = arith.constant 0 : index
    %23 = vector.load %arg4[%c0_9, %c0_10] : memref<16x32xf32, #tpu.memory_space<vmem>>, vector<16x32xf32>
    tpu.vector_store %arg4[%c0_9, %c0_10], %22 {strides = array<i32>} : memref<16x32xf32, #tpu.memory_space<vmem>>, vector<16x32xf32>,
    return
  }
  func.func @transform_0(%arg0: i32) -> (i32, i32) {
    %c0_i32 = arith.constant 0 : i32
    %c0_i32_0 = arith.constant 0 : i32
    return %arg0, %c0_i32 : i32, i32
  }
  func.func @transform_1(%arg0: i32) -> (i32, i32) {
    %c0_i32 = arith.constant 0 : i32
    %c0_i32_0 = arith.constant 0 : i32
    %c0_i32_1 = arith.constant 0 : i32
    return %c0_i32, %c0_i32_0 : i32, i32
  }
  func.func @transform_2(%arg0: i32) -> (i32, i32) {
    %c0_i32 = arith.constant 0 : i32
    %c0_i32_0 = arith.constant 0 : i32
    %c0_i32_1 = arith.constant 0 : i32
    return %c0_i32, %c0_i32_0 : i32, i32
  }
  func.func @transform_3(%arg0: i32) -> (i32, i32) {
    %c0_i32 = arith.constant 0 : i32
    %c0_i32_0 = arith.constant 0 : i32
    return %arg0, %c0_i32 : i32, i32
  }
}

</mosaic_0001>

<llo_original>
// kernel: tpu_custom_call.1
$region0: #{tpu_custom_call.1}
  #allocation0 [shape = 'u32[]', space=smem, size = 0x4, offset = 0x4, fixed_abs, tag = 'smem constant byte address 0x4 - core index']
  #allocation1 [shape = 'u32[144,128]{1,0:T(1,128)}', space=vmem, size = 0x12000, scoped, tag = 'internal scratch']
  %s0 = inlined_call_operand.hbm [shape: f32[16,32], index: 0, kind: input, shape index: {}]
  %s1 = inlined_call_operand.vmem [shape: f32[1,32], index: 1, kind: input, shape index: {}]
  %s2 = inlined_call_operand.vmem [shape: f32[1,32], index: 2, kind: input, shape index: {}]
  %s3 = inlined_call_operand.hbm [shape: f32[16,32], index: 3, kind: output, shape index: {}]
  %s4 = sld [smem:[#allocation0]]
  $region26: #{tpu_custom_call.1} parent=0
    _
  %s6 = ssub.s32 1, %s4
  %s7 = scalar_select 0, %s6, %s4
  $region1: #{tpu_custom_call.1} parent=0
    #allocation2 [shape = 'u8[8192]{0}', space=vmem, size = 0x2000, scoped, tag = 'input window, operand 0, single buffered']
    #allocation3 [shape = 's32[1]{0}', space=sflag, size = 0x4, scoped, tag = 'scoped memory for tpu_custom_call.1']
    #allocation4 [shape = 's32[1]{0}', space=sflag, size = 0x4, scoped, tag = 'scoped memory for tpu_custom_call.1']
    #allocation5 [shape = 'u8[8192]{0}', space=vmem, size = 0x2000, scoped, tag = 'output window, operand 0, single buffered']
    %8 = vsyncpa [#allocation3], 0
    %9 = vsyncpa [#allocation4], 0
    // Predicated region
    $region2: #{tpu_custom_call.1} parent=1 // pred_check
      _
    $region3: #{tpu_custom_call.1} parent=1 // pred_check_branch
      %11 = sbr.rel (0) target = $region5
    $region4: #{tpu_custom_call.1} parent=1 // pred_region
      %s13 = ssub.s32 256, 256
      %14 = vsyncadd [#allocation3], %s13
      %s15 = sshll.u32 [#allocation2], 4
      %s16 = int_to_ptr.vmem [resolvable:$true] %s15
      %21 = dma.hbm_to_vmem [thread:$0]  %s0, 256, %s16, [#allocation3], 128, 128, 8
    $region5: #{tpu_custom_call.1} parent=1 // pred_fallthru
      _
    // Predicated region
    $region6: #{tpu_custom_call.1} parent=1 // pred_check
      _
    $region7: #{tpu_custom_call.1} parent=1 // pred_check_branch
      %23 = sbr.rel (0) target = $region9
    $region8: #{tpu_custom_call.1} parent=1 // pred_region
      _
    $region9: #{tpu_custom_call.1} parent=1 // pred_fallthru
      _
    // Predicated region
    $region10: #{tpu_custom_call.1} parent=1 // pred_check
      _
    $region11: #{tpu_custom_call.1} parent=1 // pred_check_branch
      %25 = sbr.rel (0) target = $region13
    $region12: #{tpu_custom_call.1} parent=1 // pred_region
      _
    $region13: #{tpu_custom_call.1} parent=1 // pred_fallthru
      _
    // Predicated region
    $region14: #{tpu_custom_call.1} parent=1 // pred_check
      _
    $region15: #{tpu_custom_call.1} parent=1 // pred_check_branch
      %27 = sbr.rel (0) target = $region17
    $region16: #{tpu_custom_call.1} parent=1 // pred_region
      %28 = dma.done [#allocation3], 256
    $region17: #{tpu_custom_call.1} parent=1 // pred_fallthru
      _
    %v29 = vld [vmem:[#allocation2] sm:$0xff]
    %v30 = vld [vmem:[#allocation2 + $0x8] sm:$0xff]
    %vm31 = vcmask 261120
    %v32 = vsel %vm31, %v29, 0.0
    %33 = vadd.xlane.f32.xlu0 %v32
    %v34 = vpop.xlane.xlu0 %33
    %v35 = vsel %vm31, %v30, 0.0
    %36 = vadd.xlane.f32.xlu0 %v35
    %v37 = vpop.xlane.xlu0 %36
    %v38 = vrcp.pop 32.0
    %v39 = vmul.f32 %v34, %v38
    %v40 = vmul.f32 %v37, %v38
    %v41 = vsub.f32 %v29, %v39
    %v42 = vsub.f32 %v30, %v40
    %v43 = vmul.f32 %v41, %v41
    %v44 = vmul.f32 %v42, %v42
    %v45 = vsel %vm31, %v43, 0.0
    %46 = vadd.xlane.f32.xlu0 %v45
    %v47 = vpop.xlane.xlu0 %46
    %v48 = vsel %vm31, %v44, 0.0
    %49 = vadd.xlane.f32.xlu0 %v48
    %v50 = vpop.xlane.xlu0 %49
    %v51 = vmul.f32 %v47, %v38
    %v52 = vmul.f32 %v50, %v38
    %v53 = vadd.f32 %v51, 1e-05
    %v54 = vadd.f32 %v52, 1e-05
    %v55 = vrsqrt.pop %v53
    %v56 = vrsqrt.pop %v54
    %v57 = vmul.f32 %v41, %v55
    %v58 = vmul.f32 %v42, %v56
    %v59 = vld [vmem:[%s1] sm:$0x1]
    %v61 = vlaneseq
    %v62 = vshrl.u32 %v61, 7
    %v63 = vsub.s32 0, %v62
    %v64 = vrot.slane %v59, %v63
    %v66 = vmul.f32 %v57, %v64
    %v67 = vmul.f32 %v58, %v64
    %v68 = vld [vmem:[%s2] sm:$0x1]
    %v70 = vlaneseq
    %v71 = vshrl.u32 %v70, 7
    %v72 = vsub.s32 0, %v71
    %v73 = vrot.slane %v68, %v72
    %v75 = vadd.f32 %v66, %v73
    %v76 = vadd.f32 %v67, %v73
    %77 = vst.msk [vmem:[#allocation5] sm:$0xff] %vm31, %v75
    %78 = vst.msk [vmem:[#allocation5 + $0x8] sm:$0xff] %vm31, %v76
    // Predicated region
    $region18: #{tpu_custom_call.1} parent=1 // pred_check
      _
    $region19: #{tpu_custom_call.1} parent=1 // pred_check_branch
      %80 = sbr.rel (0) target = $region21
    $region20: #{tpu_custom_call.1} parent=1 // pred_region
      %s82 = ssub.s32 256, 256
      %83 = vsyncadd [#allocation4], %s82
      %s84 = sshll.u32 [#allocation5], 4
      %s85 = int_to_ptr.vmem [resolvable:$true] %s84
      %90 = dma.vmem_to_hbm [thread:$0]  %s85, 256, %s3, [#allocation4], 128, 128, 8
    $region21: #{tpu_custom_call.1} parent=1 // pred_fallthru
      _
    // Predicated region
    $region22: #{tpu_custom_call.1} parent=1 // pred_check
      _
    $region23: #{tpu_custom_call.1} parent=1 // pred_check_branch
      %92 = sbr.rel (0) target = $region25
    $region24: #{tpu_custom_call.1} parent=1 // pred_region
      %93 = dma.done [#allocation4], 256
    $region25: #{tpu_custom_call.1} parent=1 // pred_fallthru
      _
    %94 = vsyncpa [#allocation3], 1
    %95 = vsyncpa [#allocation4], 1

</llo_original>
